<compile_context>
chip_gen: v5e
topology: v5e:2x2
jax: 0.10.0
libtpu: 0.0.40
codegen_flags: <defaults>
</compile_context>

<pallas_src>
import math
from functools import partial
from itertools import combinations

import jax
import jax.numpy as jnp
from jax.experimental import pallas as pl
from jax.experimental.pallas import tpu as pltpu


def _make_fusion_kernel(num_pairs, embed_dim):
    """Fused kernel for one batch element: every pairwise cross-attention at once."""
    P, E = num_pairs, embed_dim
    PE = P * E

    def kernel(x_ref, wq_ref, wkv_ref, wo_ref, bq_ref, bkv_ref, bo_ref, out_ref):
        # x_ref:   (L, C*E)    one batch element, channels stacked along lanes
        # wq_ref:  (C*E, P*E)  block-structured Wq^T (1/sqrt(E) folded in), bf16
        # wkv_ref: (C*E, 2P*E) block-structured [Wk^T | Wv^T], bf16
        # wo_ref:  (P*E, C*E)  block-structured Wo^T (writes into BOTH pair channels), bf16
        # b*_ref:  f32 bias rows matching the column layouts above
        # out_ref: (L, C*E)    fused outputs, channels stacked along lanes (lane-dense)
        x = x_ref[...].astype(jnp.bfloat16)

        # One lane-dense matmul for all pairs' Q, one for all pairs' K and V.
        q_all = jnp.dot(x, wq_ref[...], preferred_element_type=jnp.float32) + bq_ref[...]
        kv_all = jnp.dot(x, wkv_ref[...], preferred_element_type=jnp.float32) + bkv_ref[...]

        # Tiny per-pair single-head attention; softmax kept exact and in f32.
        o_parts = []
        for p in range(P):
            q = q_all[:, p * E:(p + 1) * E].astype(jnp.bfloat16)            # (L, E)
            k = kv_all[:, p * E:(p + 1) * E].astype(jnp.bfloat16)           # (L, E)
            v = kv_all[:, PE + p * E:PE + (p + 1) * E].astype(jnp.bfloat16)  # (L, E)
            s = jnp.einsum("qe,ke->qk", q, k,
                           preferred_element_type=jnp.float32)               # (L, L)
            s = s - jnp.max(s, axis=-1, keepdims=True)
            ex = jnp.exp(s)
            attn = ex / jnp.sum(ex, axis=-1, keepdims=True)                   # exact softmax
            o_parts.append(jnp.dot(attn.astype(jnp.bfloat16), v,
                                   preferred_element_type=jnp.float32))       # (L, E)

        # Single output-projection matmul: Wo_big both projects each pair's attention
        # output and accumulates it into its two channels inside the MXU accumulator.
        o_cat = jnp.concatenate(o_parts, axis=1).astype(jnp.bfloat16)         # (L, P*E)
        y = jnp.dot(o_cat, wo_ref[...], preferred_element_type=jnp.float32) + bo_ref[...]
        out_ref[...] = y.astype(out_ref.dtype)

    return kernel


@partial(jax.jit, static_argnums=(7,))
def _forward_jit(inputs, wq_big, wkv_big, wo_big, bq_big, bkv_big, bo_big, embed_dim):
    """inputs: tuple of C arrays, each (L, N, E). Returns tuple of C fused (L, N, E)."""
    C = len(inputs)
    L, N, E = inputs[0].shape
    CE = C * E
    P = wq_big.shape[1] // embed_dim

    # Stack channels along lanes and put batch first (these layout ops fuse in XLA).
    x = jnp.stack(inputs, axis=2).reshape(L, N, CE)   # (L, N, C*E)
    x = jnp.transpose(x, (1, 0, 2))                   # (N, L, C*E)

    kernel = _make_fusion_kernel(P, embed_dim)
    out = pl.pallas_call(
        kernel,
        out_shape=jax.ShapeDtypeStruct((N, L, CE), jnp.float32),
        grid=(N,),
        in_specs=[
            pl.BlockSpec((None, L, CE), lambda b: (b, 0, 0)),
            pl.BlockSpec(wq_big.shape, lambda b: (0, 0)),
            pl.BlockSpec(wkv_big.shape, lambda b: (0, 0)),
            pl.BlockSpec(wo_big.shape, lambda b: (0, 0)),
            pl.BlockSpec(bq_big.shape, lambda b: (0, 0)),
            pl.BlockSpec(bkv_big.shape, lambda b: (0, 0)),
            pl.BlockSpec(bo_big.shape, lambda b: (0, 0)),
        ],
        out_specs=pl.BlockSpec((None, L, CE), lambda b: (b, 0, 0)),
        compiler_params=pltpu.CompilerParams(
            dimension_semantics=("parallel",)),       # batches shard across v7x cores
    )(x, wq_big, wkv_big, wo_big, bq_big, bkv_big, bo_big)

    out = jnp.transpose(out.reshape(N, L, C, E), (1, 0, 2, 3))   # (L, N, C, E)
    return tuple(out[:, :, c, :] for c in range(C))


class MultiModalModelPallas:
    """Pallas port of MultiModalModel: all pairwise cross-attentions fused in one kernel."""

    def __init__(self, embed_dim, num_chd, num_heads=1, seed=0):
        # TODO(synk): num_heads > 1 not implemented (module default is 1).
        assert num_heads == 1, "only the num_heads=1 case is implemented"
        self.embed_dim = embed_dim
        self.num_chd = num_chd
        self.pairs = tuple(combinations(range(num_chd), 2))
        self.ref_params = []

        E, C, P = embed_dim, num_chd, len(self.pairs)
        if P == 0:
            return
        scale = 1.0 / math.sqrt(E)
        bound = math.sqrt(6.0 / (2 * E))   # xavier_uniform-like init

        wq_big = jnp.zeros((C * E, P * E), jnp.float32)
        wkv_big = jnp.zeros((C * E, 2 * P * E), jnp.float32)
        wo_big = jnp.zeros((P * E, C * E), jnp.float32)
        bq_big = jnp.zeros((1, P * E), jnp.float32)
        bkv_big = jnp.zeros((1, 2 * P * E), jnp.float32)
        bo_big = jnp.zeros((1, C * E), jnp.float32)

        key = jax.random.PRNGKey(seed)
        for p, (i, j) in enumerate(self.pairs):
            key, k1, k2, k3, k4, k5, k6, k7, k8 = jax.random.split(key, 9)
            wq = jax.random.uniform(k1, (E, E), jnp.float32, -bound, bound)
            wk = jax.random.uniform(k2, (E, E), jnp.float32, -bound, bound)
            wv = jax.random.uniform(k3, (E, E), jnp.float32, -bound, bound)
            wo = jax.random.uniform(k4, (E, E), jnp.float32, -bound, bound)
            # PyTorch inits these biases to zero; use nonzero values here so the
            # correctness check also exercises the bias path in the kernel.
            bq = jax.random.uniform(k5, (E,), jnp.float32, -0.05, 0.05)
            bk = jax.random.uniform(k6, (E,), jnp.float32, -0.05, 0.05)
            bv = jax.random.uniform(k7, (E,), jnp.float32, -0.05, 0.05)
            bo = jax.random.uniform(k8, (E,), jnp.float32, -0.05, 0.05)
            self.ref_params.append((wq, wk, wv, wo, bq, bk, bv, bo))

            qr = slice(i * E, (i + 1) * E)       # query-channel row block
            kr = slice(j * E, (j + 1) * E)       # key/value-channel row block
            pc = slice(p * E, (p + 1) * E)       # this pair's column block
            pv = slice(P * E + p * E, P * E + (p + 1) * E)
            wq_big = wq_big.at[qr, pc].set(wq.T * scale)   # fold 1/sqrt(E) into Wq
            wkv_big = wkv_big.at[kr, pc].set(wk.T)
            wkv_big = wkv_big.at[kr, pv].set(wv.T)
            wo_big = wo_big.at[pc, qr].set(wo.T)           # accumulate into channel i
            wo_big = wo_big.at[pc, kr].set(wo.T)           # ... and channel j (MXU adds)
            bq_big = bq_big.at[0, pc].set(bq * scale)
            bkv_big = bkv_big.at[0, pc].set(bk)
            bkv_big = bkv_big.at[0, pv].set(bv)
            bo_big = bo_big.at[0, qr].add(bo)
            bo_big = bo_big.at[0, kr].add(bo)

        # bf16 matmul operands (f32 accumulation inside the kernel); biases stay f32.
        self.wq_big = wq_big.astype(jnp.bfloat16)
        self.wkv_big = wkv_big.astype(jnp.bfloat16)
        self.wo_big = wo_big.astype(jnp.bfloat16)
        self.bq_big, self.bkv_big, self.bo_big = bq_big, bkv_big, bo_big

    def forward(self, inputs, mask=None):
        # inputs: list of num_chd arrays, each (L, N, E) — PyTorch MHA default layout.
        if len(inputs) != self.num_chd:
            raise ValueError("input dimension does not fit")
        # TODO(synk): key_padding_mask (`mask`) not implemented; only mask=None supported.
        assert mask is None
        if not self.pairs:
            return [jnp.zeros_like(x) for x in inputs]
        out = _forward_jit(tuple(inputs), self.wq_big, self.wkv_big, self.wo_big,
                           self.bq_big, self.bkv_big, self.bo_big, self.embed_dim)
        return list(out)


def _reference_forward(model, inputs):
    """Pure-JAX f32 reference of the same math (including biases)."""
    fused = [jnp.zeros_like(inputs[c]) for c in range(model.num_chd)]
    scale = 1.0 / math.sqrt(model.embed_dim)
    for (i, j), (wq, wk, wv, wo, bq, bk, bv, bo) in zip(model.pairs, model.ref_params):
        xq = jnp.transpose(inputs[i], (1, 0, 2))    # (N, L, E)
        xkv = jnp.transpose(inputs[j], (1, 0, 2))
        q = jnp.einsum("nle,fe->nlf", xq, wq) + bq
        k = jnp.einsum("nle,fe->nlf", xkv, wk) + bk
        v = jnp.einsum("nle,fe->nlf", xkv, wv) + bv
        s = jnp.einsum("nqe,nke->nqk", q * scale, k)
        p_ = jax.nn.softmax(s, axis=-1)
        o = jnp.einsum("nqk,nke->nqe", p_, v)
        y = jnp.einsum("nle,fe->nlf", o, wo) + bo
        y = jnp.transpose(y, (1, 0, 2))             # back to (L, N, E)
        fused[i] = fused[i] + y
        fused[j] = fused[j] + y
    return fused


if __name__ == "__main__":
    embed_dim = 32
    num_chd = 3
    seq = 8
    batch = 2

    key = jax.random.PRNGKey(0)
    keys = jax.random.split(key, num_chd)
    # Each modality input: (L, N, E), PyTorch nn.MultiheadAttention default layout.
    inputs = [jax.random.normal(keys[c], (seq, batch, embed_dim), jnp.float32)
              for c in range(num_chd)]

    model = MultiModalModelPallas(embed_dim, num_chd, num_heads=1)
    outputs = model.forward(inputs)
    outputs = [jax.block_until_ready(o) for o in outputs]

    refs = _reference_forward(model, inputs)
    # Tolerance reflects bf16 matmul operands (f32 accumulation) inside the kernel;
    # the f32 reference is exact math.
    for o, r in zip(outputs, refs):
        assert o.shape == r.shape
        err = float(jnp.max(jnp.abs(o - r)))
        assert jnp.allclose(o, r, atol=5e-2, rtol=5e-2), err

    print("KERNEL_OK")
</pallas_src>

<mosaic_0001>
module attributes {stable_mosaic.version = 11 : i64} {
  func.func @kernel(%arg0: i32, %arg1: memref<1x8x96xf32, #tpu.memory_space<vmem>>, %arg2: memref<96x96xbf16, #tpu.memory_space<vmem>>, %arg3: memref<96x192xbf16, #tpu.memory_space<vmem>>, %arg4: memref<96x96xbf16, #tpu.memory_space<vmem>>, %arg5: memref<1x96xf32, #tpu.memory_space<vmem>>, %arg6: memref<1x192xf32, #tpu.memory_space<vmem>>, %arg7: memref<1x96xf32, #tpu.memory_space<vmem>>, %arg8: memref<1x8x96xf32, #tpu.memory_space<vmem>>) attributes {dimension_semantics = [#tpu.dimension_semantics<parallel>], iteration_bounds = array<i64: 2>, scalar_prefetch = 0 : i64, scratch_operands = 0 : i64, tpu.core_type = #tpu.core_type<tc>, window_params = [{transform_indices = @transform_0, window_bounds = array<i64: 1, 8, 96>}, {pipeline_mode = #tpu.pipeline_mode<synchronous>, transform_indices = @transform_1, window_bounds = array<i64: 96, 96>}, {pipeline_mode = #tpu.pipeline_mode<synchronous>, transform_indices = @transform_2, window_bounds = array<i64: 96, 192>}, {pipeline_mode = #tpu.pipeline_mode<synchronous>, transform_indices = @transform_3, window_bounds = array<i64: 96, 96>}, {pipeline_mode = #tpu.pipeline_mode<synchronous>, transform_indices = @transform_4, window_bounds = array<i64: 1, 96>}, {pipeline_mode = #tpu.pipeline_mode<synchronous>, transform_indices = @transform_5, window_bounds = array<i64: 1, 192>}, {pipeline_mode = #tpu.pipeline_mode<synchronous>, transform_indices = @transform_6, window_bounds = array<i64: 1, 96>}, {transform_indices = @transform_7, window_bounds = array<i64: 1, 8, 96>}]} {
    %c0 = arith.constant 0 : index
    %c0_0 = arith.constant 0 : index
    %c0_1 = arith.constant 0 : index
    %0 = vector.load %arg1[%c0, %c0_0, %c0_1] : memref<1x8x96xf32, #tpu.memory_space<vmem>>, vector<1x8x96xf32>
    %1 = vector.shape_cast %0 : vector<1x8x96xf32> to vector<8x96xf32>
    %2 = arith.truncf %1 : vector<8x96xf32> to vector<8x96xbf16>
    %c0_2 = arith.constant 0 : index
    %c0_3 = arith.constant 0 : index
    %3 = vector.load %arg2[%c0_2, %c0_3] : memref<96x96xbf16, #tpu.memory_space<vmem>>, vector<96x96xbf16>
    %cst = arith.constant dense<0.000000e+00> : vector<8x96xf32>
    %4 = tpu.matmul %2, %3, %cst {dimension_numbers = #tpu.dot_dimension_numbers<[1], [0], [0], [1], [0, 0, 1, 1], [], []>} : vector<8x96xbf16>, vector<96x96xbf16>, vector<8x96xf32> -> vector<8x96xf32>
    %c0_4 = arith.constant 0 : index
    %c0_5 = arith.constant 0 : index
    %5 = vector.load %arg5[%c0_4, %c0_5] : memref<1x96xf32, #tpu.memory_space<vmem>>, vector<1x96xf32>
    %6 = vector.broadcast %5 : vector<1x96xf32> to vector<8x96xf32>
    %7 = arith.addf %4, %6 : vector<8x96xf32>
    %c0_6 = arith.constant 0 : index
    %c0_7 = arith.constant 0 : index
    %8 = vector.load %arg3[%c0_6, %c0_7] : memref<96x192xbf16, #tpu.memory_space<vmem>>, vector<96x192xbf16>
    %cst_8 = arith.constant dense<0.000000e+00> : vector<8x192xf32>
    %9 = tpu.matmul %2, %8, %cst_8 {dimension_numbers = #tpu.dot_dimension_numbers<[1], [0], [0], [1], [0, 0, 1, 1], [], []>} : vector<8x96xbf16>, vector<96x192xbf16>, vector<8x192xf32> -> vector<8x192xf32>
    %c0_9 = arith.constant 0 : index
    %c0_10 = arith.constant 0 : index
    %10 = vector.load %arg6[%c0_9, %c0_10] : memref<1x192xf32, #tpu.memory_space<vmem>>, vector<1x192xf32>
    %11 = vector.broadcast %10 : vector<1x192xf32> to vector<8x192xf32>
    %12 = arith.addf %9, %11 : vector<8x192xf32>
    %13 = vector.extract_strided_slice %7 {offsets = [0, 0], sizes = [8, 32], strides = [1, 1]} : vector<8x96xf32> to vector<8x32xf32>
    %14 = arith.truncf %13 : vector<8x32xf32> to vector<8x32xbf16>
    %15 = vector.extract_strided_slice %12 {offsets = [0, 0], sizes = [8, 32], strides = [1, 1]} : vector<8x192xf32> to vector<8x32xf32>
    %16 = arith.truncf %15 : vector<8x32xf32> to vector<8x32xbf16>
    %17 = vector.extract_strided_slice %12 {offsets = [0, 96], sizes = [8, 32], strides = [1, 1]} : vector<8x192xf32> to vector<8x32xf32>
    %18 = arith.truncf %17 : vector<8x32xf32> to vector<8x32xbf16>
    "tpu.trace_start"() <{level = 10 : i32, message = "qe,ke->qk"}> : () -> ()
    %cst_11 = arith.constant dense<0.000000e+00> : vector<8x8xf32>
    %19 = tpu.matmul %14, %16, %cst_11 {dimension_numbers = #tpu.dot_dimension_numbers<[1], [1], [0], [0], [0, 0, 1, 0], [], []>} : vector<8x32xbf16>, vector<8x32xbf16>, vector<8x8xf32> -> vector<8x8xf32>
    "tpu.trace_stop"() : () -> ()
    %cst_12 = arith.constant dense<0xFF800000> : vector<8xf32>
    %20 = vector.multi_reduction <maximumf>, %19, %cst_12 [1] : vector<8x8xf32> to vector<8xf32>
    %21 = vector.shape_cast %20 : vector<8xf32> to vector<8x1xf32>
    %22 = vector.broadcast %21 : vector<8x1xf32> to vector<8x8xf32>
    %23 = arith.subf %19, %22 : vector<8x8xf32>
    %24 = math.exp %23 : vector<8x8xf32>
    %cst_13 = arith.constant dense<0.000000e+00> : vector<8xf32>
    %25 = vector.multi_reduction <add>, %24, %cst_13 [1] : vector<8x8xf32> to vector<8xf32>
    %26 = vector.shape_cast %25 : vector<8xf32> to vector<8x1xf32>
    %27 = vector.broadcast %26 : vector<8x1xf32> to vector<8x8xf32>
    %28 = arith.divf %24, %27 : vector<8x8xf32>
    %29 = arith.truncf %28 : vector<8x8xf32> to vector<8x8xbf16>
    %cst_14 = arith.constant dense<0.000000e+00> : vector<8x32xf32>
    %30 = tpu.matmul %29, %18, %cst_14 {dimension_numbers = #tpu.dot_dimension_numbers<[1], [0], [0], [1], [0, 0, 1, 1], [], []>} : vector<8x8xbf16>, vector<8x32xbf16>, vector<8x32xf32> -> vector<8x32xf32>
    %31 = vector.extract_strided_slice %7 {offsets = [0, 32], sizes = [8, 32], strides = [1, 1]} : vector<8x96xf32> to vector<8x32xf32>
    %32 = arith.truncf %31 : vector<8x32xf32> to vector<8x32xbf16>
    %33 = vector.extract_strided_slice %12 {offsets = [0, 32], sizes = [8, 32], strides = [1, 1]} : vector<8x192xf32> to vector<8x32xf32>
    %34 = arith.truncf %33 : vector<8x32xf32> to vector<8x32xbf16>
    %35 = vector.extract_strided_slice %12 {offsets = [0, 128], sizes = [8, 32], strides = [1, 1]} : vector<8x192xf32> to vector<8x32xf32>
    %36 = arith.truncf %35 : vector<8x32xf32> to vector<8x32xbf16>
    "tpu.trace_start"() <{level = 10 : i32, message = "qe,ke->qk"}> : () -> ()
    %cst_15 = arith.constant dense<0.000000e+00> : vector<8x8xf32>
    %37 = tpu.matmul %32, %34, %cst_15 {dimension_numbers = #tpu.dot_dimension_numbers<[1], [1], [0], [0], [0, 0, 1, 0], [], []>} : vector<8x32xbf16>, vector<8x32xbf16>, vector<8x8xf32> -> vector<8x8xf32>
    "tpu.trace_stop"() : () -> ()
    %cst_16 = arith.constant dense<0xFF800000> : vector<8xf32>
    %38 = vector.multi_reduction <maximumf>, %37, %cst_16 [1] : vector<8x8xf32> to vector<8xf32>
    %39 = vector.shape_cast %38 : vector<8xf32> to vector<8x1xf32>
    %40 = vector.broadcast %39 : vector<8x1xf32> to vector<8x8xf32>
    %41 = arith.subf %37, %40 : vector<8x8xf32>
    %42 = math.exp %41 : vector<8x8xf32>
    %cst_17 = arith.constant dense<0.000000e+00> : vector<8xf32>
    %43 = vector.multi_reduction <add>, %42, %cst_17 [1] : vector<8x8xf32> to vector<8xf32>
    %44 = vector.shape_cast %43 : vector<8xf32> to vector<8x1xf32>
    %45 = vector.broadcast %44 : vector<8x1xf32> to vector<8x8xf32>
    %46 = arith.divf %42, %45 : vector<8x8xf32>
    %47 = arith.truncf %46 : vector<8x8xf32> to vector<8x8xbf16>
    %cst_18 = arith.constant dense<0.000000e+00> : vector<8x32xf32>
    %48 = tpu.matmul %47, %36, %cst_18 {dimension_numbers = #tpu.dot_dimension_numbers<[1], [0], [0], [1], [0, 0, 1, 1], [], []>} : vector<8x8xbf16>, vector<8x32xbf16>, vector<8x32xf32> -> vector<8x32xf32>
    %49 = vector.extract_strided_slice %7 {offsets = [0, 64], sizes = [8, 32], strides = [1, 1]} : vector<8x96xf32> to vector<8x32xf32>
    %50 = arith.truncf %49 : vector<8x32xf32> to vector<8x32xbf16>
    %51 = vector.extract_strided_slice %12 {offsets = [0, 64], sizes = [8, 32], strides = [1, 1]} : vector<8x192xf32> to vector<8x32xf32>
    %52 = arith.truncf %51 : vector<8x32xf32> to vector<8x32xbf16>
    %53 = vector.extract_strided_slice %12 {offsets = [0, 160], sizes = [8, 32], strides = [1, 1]} : vector<8x192xf32> to vector<8x32xf32>
    %54 = arith.truncf %53 : vector<8x32xf32> to vector<8x32xbf16>
    "tpu.trace_start"() <{level = 10 : i32, message = "qe,ke->qk"}> : () -> ()
    %cst_19 = arith.constant dense<0.000000e+00> : vector<8x8xf32>
    %55 = tpu.matmul %50, %52, %cst_19 {dimension_numbers = #tpu.dot_dimension_numbers<[1], [1], [0], [0], [0, 0, 1, 0], [], []>} : vector<8x32xbf16>, vector<8x32xbf16>, vector<8x8xf32> -> vector<8x8xf32>
    "tpu.trace_stop"() : () -> ()
    %cst_20 = arith.constant dense<0xFF800000> : vector<8xf32>
    %56 = vector.multi_reduction <maximumf>, %55, %cst_20 [1] : vector<8x8xf32> to vector<8xf32>
    %57 = vector.shape_cast %56 : vector<8xf32> to vector<8x1xf32>
    %58 = vector.broadcast %57 : vector<8x1xf32> to vector<8x8xf32>
    %59 = arith.subf %55, %58 : vector<8x8xf32>
    %60 = math.exp %59 : vector<8x8xf32>
    %cst_21 = arith.constant dense<0.000000e+00> : vector<8xf32>
    %61 = vector.multi_reduction <add>, %60, %cst_21 [1] : vector<8x8xf32> to vector<8xf32>
    %62 = vector.shape_cast %61 : vector<8xf32> to vector<8x1xf32>
    %63 = vector.broadcast %62 : vector<8x1xf32> to vector<8x8xf32>
    %64 = arith.divf %60, %63 : vector<8x8xf32>
    %65 = arith.truncf %64 : vector<8x8xf32> to vector<8x8xbf16>
    %cst_22 = arith.constant dense<0.000000e+00> : vector<8x32xf32>
    %66 = tpu.matmul %65, %54, %cst_22 {dimension_numbers = #tpu.dot_dimension_numbers<[1], [0], [0], [1], [0, 0, 1, 1], [], []>} : vector<8x8xbf16>, vector<8x32xbf16>, vector<8x32xf32> -> vector<8x32xf32>
    %67 = tpu.concatenate %30, %48, %66 in 1 : vector<8x32xf32>, vector<8x32xf32>, vector<8x32xf32> -> vector<8x96xf32>
    %68 = arith.truncf %67 : vector<8x96xf32> to vector<8x96xbf16>
    %c0_23 = arith.constant 0 : index
    %c0_24 = arith.constant 0 : index
    %69 = vector.load %arg4[%c0_23, %c0_24] : memref<96x96xbf16, #tpu.memory_space<vmem>>, vector<96x96xbf16>
    %cst_25 = arith.constant dense<0.000000e+00> : vector<8x96xf32>
    %70 = tpu.matmul %68, %69, %cst_25 {dimension_numbers = #tpu.dot_dimension_numbers<[1], [0], [0], [1], [0, 0, 1, 1], [], []>} : vector<8x96xbf16>, vector<96x96xbf16>, vector<8x96xf32> -> vector<8x96xf32>
    %c0_26 = arith.constant 0 : index
    %c0_27 = arith.constant 0 : index
    %71 = vector.load %arg7[%c0_26, %c0_27] : memref<1x96xf32, #tpu.memory_space<vmem>>, vector<1x96xf32>
    %72 = vector.broadcast %71 : vector<1x96xf32> to vector<8x96xf32>
    %73 = arith.addf %70, %72 : vector<8x96xf32>
    %c0_28 = arith.constant 0 : index
    %c0_29 = arith.constant 0 : index
    %c0_30 = arith.constant 0 : index
    %74 = vector.load %arg8[%c0_28, %c0_29, %c0_30] : memref<1x8x96xf32, #tpu.memory_space<vmem>>, vector<1x8x96xf32>
    %75 = vector.shape_cast %74 : vector<1x8x96xf32> to vector<8x96xf32>
    %76 = vector.shape_cast %73 : vector<8x96xf32> to vector<1x8x96xf32>
    tpu.vector_store %arg8[%c0_28, %c0_29, %c0_30], %76 {strides = array<i32>} : memref<1x8x96xf32, #tpu.memory_space<vmem>>, vector<1x8x96xf32>,
    return
  }
  func.func @transform_0(%arg0: i32) -> (i32, i32, i32) {
    %c0_i32 = arith.constant 0 : i32
    %c0_i32_0 = arith.constant 0 : i32
    %c0_i32_1 = arith.constant 0 : i32
    return %arg0, %c0_i32, %c0_i32_0 : i32, i32, i32
  }
  func.func @transform_1(%arg0: i32) -> (i32, i32) {
    %c0_i32 = arith.constant 0 : i32
    %c0_i32_0 = arith.constant 0 : i32
    %c0_i32_1 = arith.constant 0 : i32
    return %c0_i32, %c0_i32_0 : i32, i32
  }
  func.func @transform_2(%arg0: i32) -> (i32, i32) {
    %c0_i32 = arith.constant 0 : i32
    %c0_i32_0 = arith.constant 0 : i32
    %c0_i32_1 = arith.constant 0 : i32
    return %c0_i32, %c0_i32_0 : i32, i32
  }
  func.func @transform_3(%arg0: i32) -> (i32, i32) {
    %c0_i32 = arith.constant 0 : i32
    %c0_i32_0 = arith.constant 0 : i32
    %c0_i32_1 = arith.constant 0 : i32
    return %c0_i32, %c0_i32_0 : i32, i32
  }
  func.func @transform_4(%arg0: i32) -> (i32, i32) {
    %c0_i32 = arith.constant 0 : i32
    %c0_i32_0 = arith.constant 0 : i32
    %c0_i32_1 = arith.constant 0 : i32
    return %c0_i32, %c0_i32_0 : i32, i32
  }
  func.func @transform_5(%arg0: i32) -> (i32, i32) {
    %c0_i32 = arith.constant 0 : i32
    %c0_i32_0 = arith.constant 0 : i32
    %c0_i32_1 = arith.constant 0 : i32
    return %c0_i32, %c0_i32_0 : i32, i32
  }
  func.func @transform_6(%arg0: i32) -> (i32, i32) {
    %c0_i32 = arith.constant 0 : i32
    %c0_i32_0 = arith.constant 0 : i32
    %c0_i32_1 = arith.constant 0 : i32
    return %c0_i32, %c0_i32_0 : i32, i32
  }
  func.func @transform_7(%arg0: i32) -> (i32, i32, i32) {
    %c0_i32 = arith.constant 0 : i32
    %c0_i32_0 = arith.constant 0 : i32
    %c0_i32_1 = arith.constant 0 : i32
    return %arg0, %c0_i32, %c0_i32_0 : i32, i32, i32
  }
}

</mosaic_0001>

<llo_original>
// kernel: _forward_jit.1
$region0: #{_forward_jit.1}
  #allocation0 [shape = 'u32[]', space=smem, size = 0x4, offset = 0x4, fixed_abs, tag = 'smem constant byte address 0x4 - core index']
  #allocation1 [shape = 'u32[72,128]{1,0:T(1,128)}', space=vmem, size = 0x9000, scoped, tag = 'internal scratch']
  %s0 = inlined_call_operand.vmem [shape: f32[2,8,96], index: 0, kind: input, shape index: {}]
  %s1 = inlined_call_operand.vmem [shape: bf16[96,96], index: 1, kind: input, shape index: {}]
  %s2 = inlined_call_operand.vmem [shape: bf16[96,192], index: 2, kind: input, shape index: {}]
  %s3 = inlined_call_operand.vmem [shape: bf16[96,96], index: 3, kind: input, shape index: {}]
  %s4 = inlined_call_operand.vmem [shape: f32[1,96], index: 4, kind: input, shape index: {}]
  %s5 = inlined_call_operand.vmem [shape: f32[1,192], index: 5, kind: input, shape index: {}]
  %s6 = inlined_call_operand.vmem [shape: f32[1,96], index: 6, kind: input, shape index: {}]
  %s7 = inlined_call_operand.vmem [shape: f32[2,8,96], index: 7, kind: output, shape index: {}]
  %s8 = sld [smem:[#allocation0]]
  $region61: #{_forward_jit.1} parent=0
    _
  %s10 = ssub.s32 1, %s8
  %s11 = scalar_select 0, %s10, %s8
  loop: start=0, step=1, limit=4
  $region2: #{_forward_jit.1} parent=0 // loop_pre_header
    _
  $region3: #{_forward_jit.1} parent=0 // loop_header
    %s13 = sphi 0, %s17
    %p14 = scmp.ge.s32.totalorder %s13, 4
    %s23 = sphi 0, %s25
    %s26 = sphi 0, %s23
    %s27 = sphi 0, %s26
    %s43 = sphi 0, %s27
    %s47 = sphi 0, %s47
    %s49 = sphi 0, %s47
    %s50 = sphi 0, %s49
    %s64 = sphi 0, %s50
    %s68 = sphi 0, %s68
    %s70 = sphi 0, %s68
    %s71 = sphi 0, %s70
    %s85 = sphi 0, %s71
    %s89 = sphi 0, %s89
    %s91 = sphi 0, %s89
    %s92 = sphi 0, %s91
    %s106 = sphi 0, %s92
    %s110 = sphi 0, %s110
    %s112 = sphi 0, %s110
    %s113 = sphi 0, %s112
    %s127 = sphi 0, %s113
    %s131 = sphi 0, %s131
    %s133 = sphi 0, %s131
    %s134 = sphi 0, %s133
    %s148 = sphi 0, %s134
    %s152 = sphi 0, %s152
    %s154 = sphi 0, %s152
    %s155 = sphi 0, %s154
    %s169 = sphi 0, %s155
    %s175 = sphi 0, %s177
    %s178 = sphi 0, %s175
    %s179 = sphi 0, %s178
    %s195 = sphi 0, %s179
  $region4: #{_forward_jit.1} parent=0 // loop_header_branch
    %16 = sbr.rel (%p14) target = $region8
  $region5: #{_forward_jit.1} parent=0 // loop_body
    %s18 = ssub.s32 %s13, 1
    %s19 = ssub.s32 %s13, 2
    %s20 = sadd.s32 %s13, 1
    %s21 = ssub.s32 %s13, %s20
    %p22 = scmp.eq.s32.totalorder %s21, 0
    %s24 = sadd.s32 %s23, 1
    %s25 = scalar_select %p22, %s23, %s24
    %p28 = pneg %p22
    %p29 = scmp.eq.s32.totalorder %s13, 1
    %p30 = por %p28, %p29
    %p31 = scmp.ne.s32.totalorder %s23, %s26
    %p32 = scmp.eq.s32.totalorder %s13, 0
    %p33 = por %p31, %p32
    %p34 = scmp.ne.s32.totalorder %s23, %s26
    %p35 = scmp.eq.s32.totalorder %s18, 1
    %p36 = por %p34, %p35
    %p37 = scmp.ne.s32.totalorder %s26, %s27
    %p38 = scmp.eq.s32.totalorder %s18, 0
    %p39 = por %p37, %p38
    %p40 = scmp.ne.s32.totalorder %s26, %s27
    %p41 = scmp.eq.s32.totalorder %s19, 1
    %p42 = por %p40, %p41
    %p44 = scmp.ne.s32.totalorder %s27, %s43
    %p45 = scmp.eq.s32.totalorder %s19, 0
    %p46 = por %p44, %p45
    %s48 = sadd.s32 %s47, 1
    %p51 = scmp.eq.s32.totalorder %s13, 1
    %p52 = scmp.ne.s32.totalorder %s47, %s49
    %p53 = scmp.eq.s32.totalorder %s13, 0
    %p54 = por %p52, %p53
    %p55 = scmp.ne.s32.totalorder %s47, %s49
    %p56 = scmp.eq.s32.totalorder %s18, 1
    %p57 = por %p55, %p56
    %p58 = scmp.ne.s32.totalorder %s49, %s50
    %p59 = scmp.eq.s32.totalorder %s18, 0
    %p60 = por %p58, %p59
    %p61 = scmp.ne.s32.totalorder %s49, %s50
    %p62 = scmp.eq.s32.totalorder %s19, 1
    %p63 = por %p61, %p62
    %p65 = scmp.ne.s32.totalorder %s50, %s64
    %p66 = scmp.eq.s32.totalorder %s19, 0
    %p67 = por %p65, %p66
    %s69 = sadd.s32 %s68, 1
    %p72 = scmp.eq.s32.totalorder %s13, 1
    %p73 = scmp.ne.s32.totalorder %s68, %s70
    %p74 = scmp.eq.s32.totalorder %s13, 0
    %p75 = por %p73, %p74
    %p76 = scmp.ne.s32.totalorder %s68, %s70
    %p77 = scmp.eq.s32.totalorder %s18, 1
    %p78 = por %p76, %p77
    %p79 = scmp.ne.s32.totalorder %s70, %s71
    %p80 = scmp.eq.s32.totalorder %s18, 0
    %p81 = por %p79, %p80
    %p82 = scmp.ne.s32.totalorder %s70, %s71
    %p83 = scmp.eq.s32.totalorder %s19, 1
    %p84 = por %p82, %p83
    %p86 = scmp.ne.s32.totalorder %s71, %s85
    %p87 = scmp.eq.s32.totalorder %s19, 0
    %p88 = por %p86, %p87
    %s90 = sadd.s32 %s89, 1
    %p93 = scmp.eq.s32.totalorder %s13, 1
    %p94 = scmp.ne.s32.totalorder %s89, %s91
    %p95 = scmp.eq.s32.totalorder %s13, 0
    %p96 = por %p94, %p95
    %p97 = scmp.ne.s32.totalorder %s89, %s91
    %p98 = scmp.eq.s32.totalorder %s18, 1
    %p99 = por %p97, %p98
    %p100 = scmp.ne.s32.totalorder %s91, %s92
    %p101 = scmp.eq.s32.totalorder %s18, 0
    %p102 = por %p100, %p101
    %p103 = scmp.ne.s32.totalorder %s91, %s92
    %p104 = scmp.eq.s32.totalorder %s19, 1
    %p105 = por %p103, %p104
    %p107 = scmp.ne.s32.totalorder %s92, %s106
    %p108 = scmp.eq.s32.totalorder %s19, 0
    %p109 = por %p107, %p108
    %s111 = sadd.s32 %s110, 1
    %p114 = scmp.eq.s32.totalorder %s13, 1
    %p115 = scmp.ne.s32.totalorder %s110, %s112
    %p116 = scmp.eq.s32.totalorder %s13, 0
    %p117 = por %p115, %p116
    %p118 = scmp.ne.s32.totalorder %s110, %s112
    %p119 = scmp.eq.s32.totalorder %s18, 1
    %p120 = por %p118, %p119
    %p121 = scmp.ne.s32.totalorder %s112, %s113
    %p122 = scmp.eq.s32.totalorder %s18, 0
    %p123 = por %p121, %p122
    %p124 = scmp.ne.s32.totalorder %s112, %s113
    %p125 = scmp.eq.s32.totalorder %s19, 1
    %p126 = por %p124, %p125
    %p128 = scmp.ne.s32.totalorder %s113, %s127
    %p129 = scmp.eq.s32.totalorder %s19, 0
    %p130 = por %p128, %p129
    %s132 = sadd.s32 %s131, 1
    %p135 = scmp.eq.s32.totalorder %s13, 1
    %p136 = scmp.ne.s32.totalorder %s131, %s133
    %p137 = scmp.eq.s32.totalorder %s13, 0
    %p138 = por %p136, %p137
    %p139 = scmp.ne.s32.totalorder %s131, %s133
    %p140 = scmp.eq.s32.totalorder %s18, 1
    %p141 = por %p139, %p140
    %p142 = scmp.ne.s32.totalorder %s133, %s134
    %p143 = scmp.eq.s32.totalorder %s18, 0
    %p144 = por %p142, %p143
    %p145 = scmp.ne.s32.totalorder %s133, %s134
    %p146 = scmp.eq.s32.totalorder %s19, 1
    %p147 = por %p145, %p146
    %p149 = scmp.ne.s32.totalorder %s134, %s148
    %p150 = scmp.eq.s32.totalorder %s19, 0
    %p151 = por %p149, %p150
    %s153 = sadd.s32 %s152, 1
    %p156 = scmp.eq.s32.totalorder %s13, 1
    %p157 = scmp.ne.s32.totalorder %s152, %s154
    %p158 = scmp.eq.s32.totalorder %s13, 0
    %p159 = por %p157, %p158
    %p160 = scmp.ne.s32.totalorder %s152, %s154
    %p161 = scmp.eq.s32.totalorder %s18, 1
    %p162 = por %p160, %p161
    %p163 = scmp.ne.s32.totalorder %s154, %s155
    %p164 = scmp.eq.s32.totalorder %s18, 0
    %p165 = por %p163, %p164
    %p166 = scmp.ne.s32.totalorder %s154, %s155
    %p167 = scmp.eq.s32.totalorder %s19, 1
    %p168 = por %p166, %p167
    %p170 = scmp.ne.s32.totalorder %s155, %s169
    %p171 = scmp.eq.s32.totalorder %s19, 0
    %p172 = por %p170, %p171
    %s173 = ssub.s32 %s13, %s20
    %p174 = scmp.eq.s32.totalorder %s173, 0
    %s176 = sadd.s32 %s175, 1
    %s177 = scalar_select %p174, %s175, %s176
    %p180 = pneg %p174
    %p181 = scmp.eq.s32.totalorder %s13, 1
    %p182 = por %p180, %p181
    %p183 = scmp.ne.s32.totalorder %s175, %s178
    %p184 = scmp.eq.s32.totalorder %s13, 0
    %p185 = por %p183, %p184
    %p186 = scmp.ne.s32.totalorder %s175, %s178
    %p187 = scmp.eq.s32.totalorder %s18, 1
    %p188 = por %p186, %p187
    %p189 = scmp.ne.s32.totalorder %s178, %s179
    %p190 = scmp.eq.s32.totalorder %s18, 0
    %p191 = por %p189, %p190
    %p192 = scmp.ne.s32.totalorder %s178, %s179
    %p193 = scmp.eq.s32.totalorder %s19, 1
    %p194 = por %p192, %p193
    %p196 = scmp.ne.s32.totalorder %s179, %s195
    %p197 = scmp.eq.s32.totalorder %s19, 0
    %p198 = por %p196, %p197
    %p199 = scmp.le.s32.totalorder 1, %s13
    %p200 = scmp.lt.s32.totalorder %s13, 3
    %p201 = pnand %p199, %p200
    %p202 = pneg %p201
    // Predicated region
    $region9: #{_forward_jit.1} parent=5 // pred_check
      _
    $region10: #{_forward_jit.1} parent=5 // pred_check_branch
      %204 = sbr.rel (%p201) target = $region12
    $region11: #{_forward_jit.1} parent=5 // pred_region
      %s205 = ssub.s32 %s13, 1
      // Predicated region
      $region13: #{_forward_jit.1} parent=11 // pred_check
        %p206 = pneg %p60
      $region14: #{_forward_jit.1} parent=11 // pred_check_branch
        %208 = sbr.rel (%p206) target = $region16
      $region15: #{_forward_jit.1} parent=11 // pred_region
        _
      $region16: #{_forward_jit.1} parent=11 // pred_fallthru
        _
      // Predicated region
      $region17: #{_forward_jit.1} parent=11 // pred_check
        %p209 = pneg %p81
      $region18: #{_forward_jit.1} parent=11 // pred_check_branch
        %211 = sbr.rel (%p209) target = $region20
      $region19: #{_forward_jit.1} parent=11 // pred_region
        _
      $region20: #{_forward_jit.1} parent=11 // pred_fallthru
        _
      // Predicated region
      $region21: #{_forward_jit.1} parent=11 // pred_check
        %p212 = pneg %p102
      $region22: #{_forward_jit.1} parent=11 // pred_check_branch
        %214 = sbr.rel (%p212) target = $region24
      $region23: #{_forward_jit.1} parent=11 // pred_region
        _
      $region24: #{_forward_jit.1} parent=11 // pred_fallthru
        _
      // Predicated region
      $region25: #{_forward_jit.1} parent=11 // pred_check
        %p215 = pneg %p123
      $region26: #{_forward_jit.1} parent=11 // pred_check_branch
        %217 = sbr.rel (%p215) target = $region28
      $region27: #{_forward_jit.1} parent=11 // pred_region
        _
      $region28: #{_forward_jit.1} parent=11 // pred_fallthru
        _
      // Predicated region
      $region29: #{_forward_jit.1} parent=11 // pred_check
        %p218 = pneg %p144
      $region30: #{_forward_jit.1} parent=11 // pred_check_branch
        %220 = sbr.rel (%p218) target = $region32
      $region31: #{_forward_jit.1} parent=11 // pred_region
        _
      $region32: #{_forward_jit.1} parent=11 // pred_fallthru
        _
      // Predicated region
      $region33: #{_forward_jit.1} parent=11 // pred_check
        %p221 = pneg %p165
      $region34: #{_forward_jit.1} parent=11 // pred_check_branch
        %223 = sbr.rel (%p221) target = $region36
      $region35: #{_forward_jit.1} parent=11 // pred_region
        _
      $region36: #{_forward_jit.1} parent=11 // pred_fallthru
        _
    $region12: #{_forward_jit.1} parent=5 // pred_fallthru
      _
    %p224 = scmp.lt.s32.totalorder %s13, 2
    // Predicated region
    $region37: #{_forward_jit.1} parent=5 // pred_check
      %p225 = pneg %p224
    $region38: #{_forward_jit.1} parent=5 // pred_check_branch
      %227 = sbr.rel (%p225) target = $region40
    $region39: #{_forward_jit.1} parent=5 // pred_region
      // Predicated region
      $region41: #{_forward_jit.1} parent=39 // pred_check
        %p228 = pneg %p33
      $region42: #{_forward_jit.1} parent=39 // pred_check_branch
        %230 = sbr.rel (%p228) target = $region44
      $region43: #{_forward_jit.1} parent=39 // pred_region
        %p231 = scmp.lt.s32.totalorder %s13, 1
        %s232 = scalar_select %p231, %s13, 1
        %s233 = smul.addr %s232, 8
        %s234 = scalar_lea.vmem %s0, %s233
      $region44: #{_forward_jit.1} parent=39 // pred_fallthru
        _
    $region40: #{_forward_jit.1} parent=5 // pred_fallthru
      _
    %p235 = scmp.le.s32.totalorder 1, %s13
    %p236 = scmp.lt.s32.totalorder %s13, 3
    %p237 = pnand %p235, %p236
    %p238 = pneg %p237
    // Predicated region
    $region45: #{_forward_jit.1} parent=5 // pred_check
      _
    $region46: #{_forward_jit.1} parent=5 // pred_check_branch
      %240 = sbr.rel (%p237) target = $region48
    $region47: #{_forward_jit.1} parent=5 // pred_region
      %s241 = ssub.s32 %s13, 1
      %p242 = scmp.lt.s32.totalorder %s18, 1
      %s243 = scalar_select %p242, %s18, 1
      %s244 = smul.addr %s243, 8
      %s245 = scalar_lea.vmem %s0, %s244
      %p246 = pneg %p39
      %p247 = pneg %p36
      %p248 = pneg %p60
      %p249 = pneg %p57
      %p250 = pneg %p81
      %p251 = pneg %p78
      %p252 = pneg %p102
      %p253 = pneg %p99
      %p254 = pneg %p123
      %p255 = pneg %p120
      %p256 = pneg %p144
      %p257 = pneg %p141
      %p258 = pneg %p165
      %p259 = pneg %p162
      %p260 = pneg %p191
      %p261 = pneg %p188
      %p262 = scmp.lt.s32.totalorder %s18, 1
      %s263 = scalar_select %p262, %s18, 1
      %s264 = smul.addr %s263, 8
      %s265 = scalar_lea.vmem %s7, %s264
      %p266 = scmp.lt.s32.totalorder %s18, 1
      %s267 = scalar_select %p266, %s18, 1
      %s268 = smul.addr %s267, 8
      %s269 = scalar_lea.vmem %s0, %s268
      %p270 = scmp.lt.s32.totalorder %s18, 1
      %s271 = scalar_select %p270, %s18, 1
      %s272 = smul.addr %s271, 8
      %s273 = scalar_lea.vmem %s7, %s272
      %v275 = vld [vmem:[%s269] sm:$0xff]
      %v276 = vpack.c.bf16 %v275, %v275
      %v277 = vld [vmem:[%s1] sm:$0xf]
      %v278 = vld [vmem:[%s1 + $0x4] sm:$0xf]
      %v279 = vld [vmem:[%s1 + $0x8] sm:$0xf]
      %v280 = vld [vmem:[%s1 + $0xc] sm:$0xf]
      %v281 = vld [vmem:[%s1 + $0x10] sm:$0xf]
      %v282 = vld [vmem:[%s1 + $0x14] sm:$0xf]
      %v283 = vld [vmem:[%s1 + $0x18] sm:$0xf]
      %v284 = vld [vmem:[%s1 + $0x1c] sm:$0xf]
      %v285 = vld [vmem:[%s1 + $0x20] sm:$0xf]
      %v286 = vld [vmem:[%s1 + $0x24] sm:$0xf]
      %v287 = vld [vmem:[%s1 + $0x28] sm:$0xf]
      %v288 = vld [vmem:[%s1 + $0x2c] sm:$0xf]
      %v289 = vld [vmem:[%s4] sm:$0x1]
      %v291 = vperm.slane %v289, 0
      %v305 = vunpack.c.l.b16 %v277
      %v306 = vunpack.c.l.b16 %v278
      %v307 = vunpack.c.l.b16 %v279
      %v308 = vunpack.c.l.b16 %v280
      %v309 = vunpack.c.l.b16 %v281
      %v310 = vunpack.c.l.b16 %v282
      %v311 = vunpack.c.l.b16 %v283
      %v312 = vunpack.c.l.b16 %v284
      %v313 = vunpack.c.l.b16 %v285
      %v314 = vunpack.c.l.b16 %v286
      %v315 = vunpack.c.l.b16 %v287
      %v316 = vunpack.c.l.b16 %v288
      %v317 = vpack.c.b16 %v306, %v305
      %v318 = vpack.c.b16 %v308, %v307
      %v319 = vpack.c.b16 %v310, %v309
      %v320 = vpack.c.b16 %v312, %v311
      %v321 = vpack.c.b16 %v314, %v313
      %v322 = vpack.c.b16 %v316, %v315
      %vm329 = vcmask 785408
      %v331 = vsel %vm329, %v276, 0
      %333 = vmatpush.bf16.msra.mxu0 0
      %334 = vmatpush.bf16.msra.mxu0 0
      %335 = vmatpush.bf16.msra.mxu0 %v322
      %336 = vmatpush.bf16.msra.mxu0 %v321
      %337 = vmatpush.bf16.msra.mxu0 %v320
      %338 = vmatpush.bf16.msra.mxu0 %v319
      %339 = vmatpush.bf16.msra.mxu0 %v318
      %340 = vmatpush.bf16.msra.mxu0 %v317
      %341 = vmatmul.bf16.gmra.mxu0 %v331
      %v342 = vpop.f32.mrf.mxu0
      %v343 = vadd.f32 %v291, %v342
      %v344 = vpop.f32.mrf.mxu0
      %345 = vdwg.mxu0
      %v346 = vld [vmem:[%s2] sm:$0xff]
      %v347 = vld [vmem:[%s2 + $0x8] sm:$0xff]
      %v348 = vld [vmem:[%s2 + $0x10] sm:$0xff]
      %v349 = vld [vmem:[%s2 + $0x18] sm:$0xff]
      %v350 = vld [vmem:[%s2 + $0x20] sm:$0xff]
      %v351 = vld [vmem:[%s2 + $0x28] sm:$0xff]
      %v352 = vld [vmem:[%s2 + $0x30] sm:$0xff]
      %v353 = vld [vmem:[%s2 + $0x38] sm:$0xff]
      %v354 = vld [vmem:[%s2 + $0x40] sm:$0xff]
      %v355 = vld [vmem:[%s2 + $0x48] sm:$0xff]
      %v356 = vld [vmem:[%s2 + $0x50] sm:$0xff]
      %v357 = vld [vmem:[%s2 + $0x58] sm:$0xff]
      %v358 = vld [vmem:[%s5] sm:$0x3]
      %v360 = vperm.slane %v358, 0
      %v361 = vperm.slane %v358, 1
      %v376 = vunpack.c.l.b16 %v346
      %v377 = vunpack.c.h.b16 %v346
      %v378 = vunpack.c.l.b16 %v347
      %v379 = vunpack.c.h.b16 %v347
      %v380 = vunpack.c.l.b16 %v348
      %v381 = vunpack.c.h.b16 %v348
      %v382 = vunpack.c.l.b16 %v349
      %v383 = vunpack.c.h.b16 %v349
      %v384 = vunpack.c.l.b16 %v350
      %v385 = vunpack.c.h.b16 %v350
      %v386 = vunpack.c.l.b16 %v351
      %v387 = vunpack.c.h.b16 %v351
      %v388 = vunpack.c.l.b16 %v352
      %v389 = vunpack.c.h.b16 %v352
      %v390 = vunpack.c.l.b16 %v353
      %v391 = vunpack.c.h.b16 %v353
      %v392 = vunpack.c.l.b16 %v354
      %v393 = vunpack.c.h.b16 %v354
      %v394 = vunpack.c.l.b16 %v355
      %v395 = vunpack.c.h.b16 %v355
      %v396 = vunpack.c.l.b16 %v356
      %v397 = vunpack.c.h.b16 %v356
      %v398 = vunpack.c.l.b16 %v357
      %v399 = vunpack.c.h.b16 %v357
      %v400 = vpack.c.b16 %v378, %v376
      %v401 = vpack.c.b16 %v379, %v377
      %v402 = vpack.c.b16 %v382, %v380
      %v403 = vpack.c.b16 %v383, %v381
      %v404 = vpack.c.b16 %v386, %v384
      %v405 = vpack.c.b16 %v387, %v385
      %v406 = vpack.c.b16 %v390, %v388
      %v407 = vpack.c.b16 %v391, %v389
      %v408 = vpack.c.b16 %v394, %v392
      %v409 = vpack.c.b16 %v395, %v393
      %v410 = vpack.c.b16 %v398, %v396
      %v411 = vpack.c.b16 %v399, %v397
      %424 = vmatpush.bf16.msra.mxu0 0
      %425 = vmatpush.bf16.msra.mxu0 0
      %426 = vmatpush.bf16.msra.mxu0 %v410
      %427 = vmatpush.bf16.msra.mxu0 %v408
      %428 = vmatpush.bf16.msra.mxu0 %v406
      %429 = vmatpush.bf16.msra.mxu0 %v404
      %430 = vmatpush.bf16.msra.mxu0 %v402
      %431 = vmatpush.bf16.msra.mxu0 %v400
      %432 = vmatmul.bf16.gmra.mxu0 %v331
      %v433 = vpop.f32.mrf.mxu0
      %v434 = vadd.f32 %v360, %v433
      %v435 = vpop.f32.mrf.mxu0
      %436 = vdwg.mxu0
      %437 = vmatpush.bf16.msra.mxu0 0
      %438 = vmatpush.bf16.msra.mxu0 0
      %439 = vmatpush.bf16.msra.mxu0 %v411
      %440 = vmatpush.bf16.msra.mxu0 %v409
      %441 = vmatpush.bf16.msra.mxu0 %v407
      %442 = vmatpush.bf16.msra.mxu0 %v405
      %443 = vmatpush.bf16.msra.mxu0 %v403
      %444 = vmatpush.bf16.msra.mxu0 %v401
      %445 = vmatmul.bf16.gmra.mxu0 %v331
      %v446 = vpop.f32.mrf.mxu0
      %v447 = vadd.f32 %v361, %v446
      %v448 = vpop.f32.mrf.mxu0
      %449 = vdwg.mxu0
      %v450 = vpack.c.bf16 %v343, %v343
      %v451 = vpack.c.bf16 %v434, %v434
      %vm452 = vcmask 261120
      %v454 = vsel %vm452, %v450, 0
      %v457 = vsel %vm452, %v451, 0
      %459 = vmatpush.bf16.xpose.msra.mxu0 0
      %460 = vmatpush.bf16.xpose.msra.mxu0 0
      %461 = vmatpush.bf16.xpose.msra.mxu0 0
      %462 = vmatpush.bf16.xpose.msra.mxu0 0
      %463 = vmatpush.bf16.xpose.msra.mxu0 0
      %464 = vmatpush.bf16.xpose.msra.mxu0 0
      %465 = vmatpush.bf16.xpose.msra.mxu0 0
      %466 = vmatpush.bf16.xpose.msra.mxu0 %v457
      %467 = vmatmul.bf16.gmra.mxu0 %v454
      %v468 = vpop.f32.mrf.mxu0
      %v469 = vadd.f32 0.0, %v468
      %v470 = vpop.f32.mrf.mxu0
      %471 = vdwg.mxu0
      %vm472 = vcmask 64512
      %v473 = vsel %vm472, %v469, -inf
      %474 = vmax.xlane.f32.xlu0 %v473
      %v475 = vpop.xlane.xlu0 %474
      %v476 = vsub.f32 %v469, %v475
      %v477 = vmul.f32 %v476, 1.442695
      %v478 = vpow.pop %v477
      %v479 = vsel %vm472, %v478, 0.0
      %480 = vadd.xlane.f32.xlu0 %v479
      %v481 = vpop.xlane.xlu0 %480
      %v482 = vrcp.pop %v481
      %v483 = vmul.f32 %v481, %v482
      %v484 = vsub.f32 1.0, %v483
      %v485 = vmul.f32 %v482, %v484
      %v486 = vadd.f32 %v482, %v485
      %vm487 = vweird.f32 %v481
      %vm488 = vweird.f32 %v482
      %vm489 = vmor %vm487, %vm488
      %v490 = vsel %vm489, %v482, %v486
      %v491 = vand.u32 2147483647, %v481
      %vm492 = vcmp.eq.f32.partialorder %v491, 8.507059e+37
      %v493 = vand.u32 %v481, 2147483648
      %v494 = vor.u32 1.1754944e-38, %v493
      %v495 = vsel %vm492, %v494, %v490
      %v496 = vmul.f32 %v478, %v495
      %v497 = vpack.c.bf16 %v496, %v496
      %499 = vrot.lane.b32.xlu0 %v451, 32
      %v500 = vpop.permute.xlu0 %499
      %v502 = vsel %vm472, %v497, 0
      %vm504 = vcmask 1043456
      %v506 = vsel %vm504, %v500, 0
      %508 = vmatpush.bf16.msra.mxu0 0
      %509 = vmatpush.bf16.msra.mxu0 0
      %510 = vmatpush.bf16.msra.mxu0 0
      %511 = vmatpush.bf16.msra.mxu0 0
      %512 = vmatpush.bf16.msra.mxu0 0
      %513 = vmatpush.bf16.msra.mxu0 0
      %514 = vmatpush.bf16.msra.mxu0 0
      %515 = vmatpush.bf16.msra.mxu0 %v506
      %516 = vmatmul.bf16.gmra.mxu0 %v502
      %v517 = vpop.f32.mrf.mxu0
      %v518 = vadd.f32 0.0, %v517
      %v519 = vpop.f32.mrf.mxu0
      %520 = vdwg.mxu0
      %v521 = vpack.c.bf16 %v447, %v447
      %523 = vrot.lane.b32.xlu0 %v450, 96
      %v524 = vpop.permute.xlu0 %523
      %525 = vrot.lane.b32.xlu0 %v451, 96
      %v526 = vpop.permute.xlu0 %525
      %v528 = vsel %vm452, %v524, 0
      %v531 = vsel %vm452, %v526, 0
      %533 = vmatpush.bf16.xpose.msra.mxu0 0
      %534 = vmatpush.bf16.xpose.msra.mxu0 0
      %535 = vmatpush.bf16.xpose.msra.mxu0 0
      %536 = vmatpush.bf16.xpose.msra.mxu0 0
      %537 = vmatpush.bf16.xpose.msra.mxu0 0
      %538 = vmatpush.bf16.xpose.msra.mxu0 0
      %539 = vmatpush.bf16.xpose.msra.mxu0 0
      %540 = vmatpush.bf16.xpose.msra.mxu0 %v531
      %541 = vmatmul.bf16.gmra.mxu0 %v528
      %v542 = vpop.f32.mrf.mxu0
      %v543 = vadd.f32 0.0, %v542
      %v544 = vpop.f32.mrf.mxu0
      %545 = vdwg.mxu0
      %v546 = vsel %vm472, %v543, -inf
      %547 = vmax.xlane.f32.xlu0 %v546
      %v548 = vpop.xlane.xlu0 %547
      %v549 = vsub.f32 %v543, %v548
      %v550 = vmul.f32 %v549, 1.442695
      %v551 = vpow.pop %v550
      %v552 = vsel %vm472, %v551, 0.0
      %553 = vadd.xlane.f32.xlu0 %v552
      %v554 = vpop.xlane.xlu0 %553
      %v555 = vrcp.pop %v554
      %v556 = vmul.f32 %v554, %v555
      %v557 = vsub.f32 1.0, %v556
      %v558 = vmul.f32 %v555, %v557
      %v559 = vadd.f32 %v555, %v558
      %vm560 = vweird.f32 %v554
      %vm561 = vweird.f32 %v555
      %vm562 = vmor %vm560, %vm561
      %v563 = vsel %vm562, %v555, %v559
      %v564 = vand.u32 2147483647, %v554
      %vm565 = vcmp.eq.f32.partialorder %v564, 8.507059e+37
      %v566 = vand.u32 %v554, 2147483648
      %v567 = vor.u32 1.1754944e-38, %v566
      %v568 = vsel %vm565, %v567, %v563
      %v569 = vmul.f32 %v551, %v568
      %v570 = vpack.c.bf16 %v569, %v569
      %v572 = vsel %vm472, %v570, 0
      %v575 = vsel %vm504, %v521, 0
      %577 = vmatpush.bf16.msra.mxu0 0
      %578 = vmatpush.bf16.msra.mxu0 0
      %579 = vmatpush.bf16.msra.mxu0 0
      %580 = vmatpush.bf16.msra.mxu0 0
      %581 = vmatpush.bf16.msra.mxu0 0
      %582 = vmatpush.bf16.msra.mxu0 0
      %583 = vmatpush.bf16.msra.mxu0 0
      %584 = vmatpush.bf16.msra.mxu0 %v575
      %585 = vmatmul.bf16.gmra.mxu0 %v572
      %v586 = vpop.f32.mrf.mxu0
      %v587 = vadd.f32 0.0, %v586
      %v588 = vpop.f32.mrf.mxu0
      %589 = vdwg.mxu0
      %590 = vrot.lane.b32.xlu0 %v450, 64
      %v591 = vpop.permute.xlu0 %590
      %592 = vrot.lane.b32.xlu0 %v451, 64
      %v593 = vpop.permute.xlu0 %592
      %v595 = vsel %vm452, %v591, 0
      %v598 = vsel %vm452, %v593, 0
      %600 = vmatpush.bf16.xpose.msra.mxu0 0
      %601 = vmatpush.bf16.xpose.msra.mxu0 0
      %602 = vmatpush.bf16.xpose.msra.mxu0 0
      %603 = vmatpush.bf16.xpose.msra.mxu0 0
      %604 = vmatpush.bf16.xpose.msra.mxu0 0
      %605 = vmatpush.bf16.xpose.msra.mxu0 0
      %606 = vmatpush.bf16.xpose.msra.mxu0 0
      %607 = vmatpush.bf16.xpose.msra.mxu0 %v598
      %608 = vmatmul.bf16.gmra.mxu0 %v595
      %v609 = vpop.f32.mrf.mxu0
      %v610 = vadd.f32 0.0, %v609
      %v611 = vpop.f32.mrf.mxu0
      %612 = vdwg.mxu0
      %v613 = vsel %vm472, %v610, -inf
      %614 = vmax.xlane.f32.xlu0 %v613
      %v615 = vpop.xlane.xlu0 %614
      %v616 = vsub.f32 %v610, %v615
      %v617 = vmul.f32 %v616, 1.442695
      %v618 = vpow.pop %v617
      %v619 = vsel %vm472, %v618, 0.0
      %620 = vadd.xlane.f32.xlu0 %v619
      %v621 = vpop.xlane.xlu0 %620
      %v622 = vrcp.pop %v621
      %v623 = vmul.f32 %v621, %v622
      %v624 = vsub.f32 1.0, %v623
      %v625 = vmul.f32 %v622, %v624
      %v626 = vadd.f32 %v622, %v625
      %vm627 = vweird.f32 %v621
      %vm628 = vweird.f32 %v622
      %vm629 = vmor %vm627, %vm628
      %v630 = vsel %vm629, %v622, %v626
      %v631 = vand.u32 2147483647, %v621
      %vm632 = vcmp.eq.f32.partialorder %v631, 8.507059e+37
      %v633 = vand.u32 %v621, 2147483648
      %v634 = vor.u32 1.1754944e-38, %v633
      %v635 = vsel %vm632, %v634, %v630
      %v636 = vmul.f32 %v618, %v635
      %v637 = vpack.c.bf16 %v636, %v636
      %639 = vrot.lane.b32.xlu0 %v521, 96
      %v640 = vpop.permute.xlu0 %639
      %v642 = vsel %vm472, %v637, 0
      %v645 = vsel %vm504, %v640, 0
      %647 = vmatpush.bf16.msra.mxu0 0
      %648 = vmatpush.bf16.msra.mxu0 0
      %649 = vmatpush.bf16.msra.mxu0 0
      %650 = vmatpush.bf16.msra.mxu0 0
      %651 = vmatpush.bf16.msra.mxu0 0
      %652 = vmatpush.bf16.msra.mxu0 0
      %653 = vmatpush.bf16.msra.mxu0 0
      %654 = vmatpush.bf16.msra.mxu0 %v645
      %655 = vmatmul.bf16.gmra.mxu0 %v642
      %v656 = vpop.f32.mrf.mxu0
      %v657 = vadd.f32 0.0, %v656
      %v658 = vpop.f32.mrf.mxu0
      %659 = vdwg.mxu0
      %661 = vrot.lane.b32.xlu0 %v587, 32
      %v662 = vpop.permute.xlu0 %661
      %665 = vrot.lane.b32.xlu0 %v657, 64
      %v666 = vpop.permute.xlu0 %665
      %v668 = vsel %vm452, %v518, %v662
      %vm669 = vcmask 523264
      %v670 = vsel %vm669, %v668, %v666
      %v671 = vpack.c.bf16 %v670, %v670
      %v672 = vld [vmem:[%s3] sm:$0xf]
      %v673 = vld [vmem:[%s3 + $0x4] sm:$0xf]
      %v674 = vld [vmem:[%s3 + $0x8] sm:$0xf]
      %v675 = vld [vmem:[%s3 + $0xc] sm:$0xf]
      %v676 = vld [vmem:[%s3 + $0x10] sm:$0xf]
      %v677 = vld [vmem:[%s3 + $0x14] sm:$0xf]
      %v678 = vld [vmem:[%s3 + $0x18] sm:$0xf]
      %v679 = vld [vmem:[%s3 + $0x1c] sm:$0xf]
      %v680 = vld [vmem:[%s3 + $0x20] sm:$0xf]
      %v681 = vld [vmem:[%s3 + $0x24] sm:$0xf]
      %v682 = vld [vmem:[%s3 + $0x28] sm:$0xf]
      %v683 = vld [vmem:[%s3 + $0x2c] sm:$0xf]
      %v684 = vld [vmem:[%s6] sm:$0x1]
      %v686 = vperm.slane %v684, 0
      %v700 = vunpack.c.l.b16 %v672
      %v701 = vunpack.c.l.b16 %v673
      %v702 = vunpack.c.l.b16 %v674
      %v703 = vunpack.c.l.b16 %v675
      %v704 = vunpack.c.l.b16 %v676
      %v705 = vunpack.c.l.b16 %v677
      %v706 = vunpack.c.l.b16 %v678
      %v707 = vunpack.c.l.b16 %v679
      %v708 = vunpack.c.l.b16 %v680
      %v709 = vunpack.c.l.b16 %v681
      %v710 = vunpack.c.l.b16 %v682
      %v711 = vunpack.c.l.b16 %v683
      %v712 = vpack.c.b16 %v701, %v700
      %v713 = vpack.c.b16 %v703, %v702
      %v714 = vpack.c.b16 %v705, %v704
      %v715 = vpack.c.b16 %v707, %v706
      %v716 = vpack.c.b16 %v709, %v708
      %v717 = vpack.c.b16 %v711, %v710
      %v725 = vsel %vm329, %v671, 0
      %727 = vmatpush.bf16.msra.mxu0 0
      %728 = vmatpush.bf16.msra.mxu0 0
      %729 = vmatpush.bf16.msra.mxu0 %v717
      %730 = vmatpush.bf16.msra.mxu0 %v716
      %731 = vmatpush.bf16.msra.mxu0 %v715
      %732 = vmatpush.bf16.msra.mxu0 %v714
      %733 = vmatpush.bf16.msra.mxu0 %v713
      %734 = vmatpush.bf16.msra.mxu0 %v712
      %735 = vmatmul.bf16.gmra.mxu0 %v725
      %v736 = vpop.f32.mrf.mxu0
      %v737 = vadd.f32 %v686, %v736
      %v738 = vpop.f32.mrf.mxu0
      %739 = vdwg.mxu0
      %740 = vst.msk [vmem:[%s273] sm:$0xff] %vm329, %v737
      %p741 = scmp.lt.s32.totalorder %s18, 1
      %s742 = scalar_select %p741, %s18, 1
      %s743 = smul.addr %s742, 8
      %s744 = scalar_lea.vmem %s7, %s743
      // Predicated region
      $region49: #{_forward_jit.1} parent=47 // pred_check
        %p745 = pneg %p188
      $region50: #{_forward_jit.1} parent=47 // pred_check_branch
        %747 = sbr.rel (%p745) target = $region52
      $region51: #{_forward_jit.1} parent=47 // pred_region
        _
      $region52: #{_forward_jit.1} parent=47 // pred_fallthru
        _
    $region48: #{_forward_jit.1} parent=5 // pred_fallthru
      _
    %p748 = scmp.le.s32.totalorder 2, %s13
    // Predicated region
    $region53: #{_forward_jit.1} parent=5 // pred_check
      %p749 = pneg %p748
    $region54: #{_forward_jit.1} parent=5 // pred_check_branch
      %751 = sbr.rel (%p749) target = $region56
    $region55: #{_forward_jit.1} parent=5 // pred_region
      %s752 = ssub.s32 %s13, 2
      // Predicated region
      $region57: #{_forward_jit.1} parent=55 // pred_check
        %p753 = pneg %p194
      $region58: #{_forward_jit.1} parent=55 // pred_check_branch
        %755 = sbr.rel (%p753) target = $region60
      $region59: #{_forward_jit.1} parent=55 // pred_region
        %p756 = scmp.lt.s32.totalorder %s19, 1
        %s757 = scalar_select %p756, %s19, 1
        %s758 = smul.addr %s757, 8
        %s759 = scalar_lea.vmem %s7, %s758
      $region60: #{_forward_jit.1} parent=55 // pred_fallthru
        _
    $region56: #{_forward_jit.1} parent=5 // pred_fallthru
      _
  $region6: #{_forward_jit.1} parent=0 // loop_footer
    %s17 = sadd.s32 1, %s13
  $region7: #{_forward_jit.1} parent=0 // loop_footer_branch
    %12 = sbr.rel target = $region3
  $region8: #{_forward_jit.1} parent=0 // loop_exit
    _

</llo_original>
